<compile_context>
chip_gen: v7x
topology: tpu7x:2x2x1
jax: 0.10.0
libtpu: 0.0.40
codegen_flags: <defaults>
</compile_context>

<pallas_src>
import functools
import math

import jax
import jax.numpy as jnp
from jax.experimental import pallas as pl
from jax.experimental.pallas import tpu as pltpu


def _vmem_capacity_bytes():
    try:
        return int(pltpu.get_tpu_info().vmem_capacity_bytes)
    except Exception:
        return 128 * 1024 * 1024  # v5e/v6e default


def _sdpa_kernel(q_ref, k_ref, v_ref, m_ref, ctx_ref, attn_ref, *,
                 inv_sqrt_dk, gamma, qk_dtype):
    # q_ref: (G, TQ, Dk)  k_ref: (G, S, Dk)  v_ref: (G, S, Dv)
    # m_ref: (G, TQ, S)   ctx_ref: (G, TQ, Dv)  attn_ref: (G, TQ, S)
    q = q_ref[...]
    k = k_ref[...]
    if qk_dtype is not None and q.dtype != qk_dtype:
        # Optional bf16 MXU operands for f32 inputs (full-rate MXU on v5e/v6e).
        q = q.astype(qk_dtype)
        k = k.astype(qk_dtype)
    q = q * inv_sqrt_dk                       # fold 1/sqrt(d_k) into Q (O(S*Dk))
    v = v_ref[...]

    # scores = (Q / sqrt(d_k)) @ K^T -- batched contraction on K's last dim
    # (no materialized transpose), f32 MXU accumulation.
    scores = jnp.einsum("gqd,gkd->gqk", q, k, preferred_element_type=jnp.float32)

    # numerically stable softmax along the key axis (f32)
    scores_max = jnp.max(scores, axis=-1, keepdims=True)
    exp_scores = jnp.exp(scores - scores_max)
    denom = jnp.sum(exp_scores, axis=-1, keepdims=True)
    attn = exp_scores / denom                 # exact: denom is only (G,TQ,1)

    # blend with visible_M in V's dtype (no S^2 f32 upcast when inputs are bf16)
    vm = m_ref[...].astype(v.dtype)
    blended = attn.astype(v.dtype) * gamma + vm * (1.0 - gamma)
    context = jnp.einsum("gqk,gkd->gqd", blended, v,
                         preferred_element_type=jnp.float32)

    ctx_ref[...] = context.astype(ctx_ref.dtype)
    attn_ref[...] = attn.astype(attn_ref.dtype)


def scaled_dot_product_attention(Q, K, V, attn_mask, visible_M, *, d_k, gamma,
                                 attn_dtype=None, mxu_dtype=None):
    """Pallas implementation of ScaledDotProductAttention.forward.

    Q, K: [B, H, S, d_k]; V: [B, H, S, d_v]; visible_M: [B, H, S, S].
    Returns (context [B, H, S, d_v], attn [B, H, S, S]).

    attn_dtype: dtype of the returned attention weights (default: Q.dtype).
        Passing jnp.bfloat16 halves the dominant S^2 HBM write traffic.
    mxu_dtype: optional dtype for the Q/K matmul operands (e.g. jnp.bfloat16
        on v5e/v6e for f32 inputs); accumulation stays f32.
    `attn_mask` is accepted for signature parity but (as in the PyTorch
    module) is not used.
    """
    del attn_mask  # unused in the reference forward pass
    B, H, S, Dk = Q.shape
    Dv = V.shape[-1]
    BH = B * H
    out_dtype = Q.dtype
    attn_dtype = jnp.dtype(out_dtype if attn_dtype is None else attn_dtype)

    q = Q.reshape(BH, S, Dk)
    k = K.reshape(BH, S, Dk)
    v = V.reshape(BH, S, Dv)
    m = visible_M.reshape(BH, S, S)

    q_item = jnp.dtype(q.dtype).itemsize
    k_item = jnp.dtype(k.dtype).itemsize
    v_item = jnp.dtype(v.dtype).itemsize
    m_item = jnp.dtype(m.dtype).itemsize
    a_item = attn_dtype.itemsize
    o_item = jnp.dtype(out_dtype).itemsize

    # ---- chip-aware VMEM budget -------------------------------------------
    vmem_cap = _vmem_capacity_bytes()           # 128 MiB v5e/v6e, 64 MiB v7x
    budget = int(vmem_cap * 0.75)
    max_tq = 512 if vmem_cap >= (96 << 20) else 256

    def footprint(tq_, g_):
        return (
            2 * g_ * tq_ * Dk * q_item          # Q tile (double-buffered)
            + 2 * g_ * S * Dk * k_item          # K (VMEM-resident across qi)
            + 2 * g_ * S * Dv * v_item          # V (VMEM-resident across qi)
            + 2 * g_ * tq_ * S * m_item         # visible_M tile
            + 2 * g_ * tq_ * Dv * o_item        # ctx out tile
            + 2 * g_ * tq_ * S * a_item         # attn out tile
            + 4 * g_ * tq_ * S * 4              # f32 scores/exp/attn/blend temps
        )

    # ---- query tile: a divisor of S => no pad, no output slice -------------
    if S % 8 != 0:
        tq = S  # block's second-minor dim must be 8-aligned or full extent
    else:
        start = (min(S, max_tq) // 8) * 8
        cands = [d for d in range(start, 7, -8) if S % d == 0]
        tq = cands[-1] if cands else S
        for c in cands:
            if footprint(c, 1) <= budget:
                tq = c
                break
    num_q_tiles = S // tq
    # TODO(synk): for S so large that resident K/V alone exceed VMEM, a
    # key-tiled online-softmax variant would be required.

    # ---- head-group batching: target >= ~3 MB of S^2 traffic per step ------
    step_io = tq * S * (m_item + a_item)
    g_target = max(1, (3 << 20) // max(step_io, 1))
    g_cap = BH // 2 if BH >= 2 else 1           # keep >=2 outer steps (2 TCs)
    G = 1
    for g in range(min(g_target, max(g_cap, 1), BH), 0, -1):
        if BH % g == 0 and footprint(tq, g) <= budget:
            G = g
            break

    grid = (BH // G, num_q_tiles)
    vmem_limit = int(min(int(vmem_cap * 0.85),
                         max(32 << 20, int(1.5 * footprint(tq, G)))))

    kernel = functools.partial(
        _sdpa_kernel,
        inv_sqrt_dk=1.0 / math.sqrt(d_k),
        gamma=float(gamma),
        qk_dtype=None if mxu_dtype is None else jnp.dtype(mxu_dtype),
    )

    ctx, attn = pl.pallas_call(
        kernel,
        out_shape=(
            jax.ShapeDtypeStruct((BH, S, Dv), out_dtype),
            jax.ShapeDtypeStruct((BH, S, S), attn_dtype),
        ),
        grid_spec=pltpu.PrefetchScalarGridSpec(
            num_scalar_prefetch=0,
            grid=grid,
            in_specs=[
                pl.BlockSpec((G, tq, Dk), lambda g, qi: (g, qi, 0)),
                pl.BlockSpec((G, S, Dk), lambda g, qi: (g, 0, 0)),  # resident over qi
                pl.BlockSpec((G, S, Dv), lambda g, qi: (g, 0, 0)),  # resident over qi
                pl.BlockSpec((G, tq, S), lambda g, qi: (g, qi, 0)),
            ],
            out_specs=[
                # NOTE: ctx's last dim (Dv) may be < 128 -> masked stores, but
                # ctx traffic is ~Dv/S of the attn traffic; a lane-dense repack
                # would need an in-kernel relayout for a negligible win.
                pl.BlockSpec((G, tq, Dv), lambda g, qi: (g, qi, 0)),
                pl.BlockSpec((G, tq, S), lambda g, qi: (g, qi, 0)),
            ],
        ),
        compiler_params=pltpu.CompilerParams(
            dimension_semantics=("parallel", "arbitrary"),
            vmem_limit_bytes=vmem_limit,
        ),
    )(q, k, v, m)

    return ctx.reshape(B, H, S, Dv), attn.reshape(B, H, S, S)


def _reference(Q, K, V, visible_M, d_k, gamma):
    scores = jnp.einsum("bhqd,bhkd->bhqk", Q, K) / math.sqrt(d_k)
    attn = jax.nn.softmax(scores, axis=-1)
    context = jnp.einsum("bhqk,bhkd->bhqd", attn * gamma + visible_M * (1 - gamma), V)
    return context, attn


if __name__ == "__main__":
    B, H, S, d_k, d_v = 2, 2, 8, 16, 16
    gamma = 0.7

    key = jax.random.PRNGKey(0)
    kq, kk, kv, km = jax.random.split(key, 4)
    Q = jax.random.normal(kq, (B, H, S, d_k), dtype=jnp.float32)
    K = jax.random.normal(kk, (B, H, S, d_k), dtype=jnp.float32)
    V = jax.random.normal(kv, (B, H, S, d_v), dtype=jnp.float32)
    visible_M = jax.nn.softmax(
        jax.random.normal(km, (B, H, S, S), dtype=jnp.float32), axis=-1
    )
    attn_mask = jnp.zeros((B, H, S, S), dtype=jnp.float32)  # unused, parity only

    ctx_ref, attn_ref = _reference(Q, K, V, visible_M, d_k, gamma)

    # ---- default (full-precision) path -------------------------------------
    ctx, attn = scaled_dot_product_attention(
        Q, K, V, attn_mask, visible_M, d_k=d_k, gamma=gamma
    )
    jax.block_until_ready((ctx, attn))
    # Softmax reciprocal is now exact; remaining slack only covers MXU
    # pass-precision differences between the Pallas matmul and the XLA einsum.
    assert jnp.allclose(ctx, ctx_ref, atol=2e-3, rtol=2e-3)
    assert jnp.allclose(attn, attn_ref, atol=1e-3, rtol=1e-3)

    # ---- reduced-precision S^2 I/O path (bf16 visible_M / attn / QK MXU) ----
    ctx_lp, attn_lp = scaled_dot_product_attention(
        Q, K, V, attn_mask, visible_M.astype(jnp.bfloat16),
        d_k=d_k, gamma=gamma, attn_dtype=jnp.bfloat16, mxu_dtype=jnp.bfloat16,
    )
    jax.block_until_ready((ctx_lp, attn_lp))
    assert jnp.allclose(ctx_lp.astype(jnp.float32), ctx_ref, atol=5e-2, rtol=5e-2)
    assert jnp.allclose(attn_lp.astype(jnp.float32), attn_ref, atol=5e-2, rtol=5e-2)

    print("KERNEL_OK")
</pallas_src>

<mosaic_0001>
module attributes {stable_mosaic.version = 11 : i64} {
  func.func @_sdpa_kernel(%arg0: i32, %arg1: i32, %arg2: memref<2x8x16xf32, #tpu.memory_space<vmem>>, %arg3: memref<2x8x16xf32, #tpu.memory_space<vmem>>, %arg4: memref<2x8x16xf32, #tpu.memory_space<vmem>>, %arg5: memref<2x8x8xf32, #tpu.memory_space<vmem>>, %arg6: memref<2x8x16xf32, #tpu.memory_space<vmem>>, %arg7: memref<2x8x8xf32, #tpu.memory_space<vmem>>) attributes {dimension_semantics = [#tpu.dimension_semantics<parallel>, #tpu.dimension_semantics<arbitrary>], iteration_bounds = array<i64: 2, 1>, scalar_prefetch = 0 : i64, scratch_operands = 0 : i64, tpu.core_type = #tpu.core_type<tc>, window_params = [{transform_indices = @transform_0, window_bounds = array<i64: 2, 8, 16>}, {transform_indices = @transform_1, window_bounds = array<i64: 2, 8, 16>}, {transform_indices = @transform_2, window_bounds = array<i64: 2, 8, 16>}, {transform_indices = @transform_3, window_bounds = array<i64: 2, 8, 8>}, {transform_indices = @transform_4, window_bounds = array<i64: 2, 8, 16>}, {transform_indices = @transform_5, window_bounds = array<i64: 2, 8, 8>}]} {
    %c0 = arith.constant 0 : index
    %c0_0 = arith.constant 0 : index
    %c0_1 = arith.constant 0 : index
    %0 = vector.load %arg2[%c0, %c0_0, %c0_1] : memref<2x8x16xf32, #tpu.memory_space<vmem>>, vector<2x8x16xf32>
    %c0_2 = arith.constant 0 : index
    %c0_3 = arith.constant 0 : index
    %c0_4 = arith.constant 0 : index
    %1 = vector.load %arg3[%c0_2, %c0_3, %c0_4] : memref<2x8x16xf32, #tpu.memory_space<vmem>>, vector<2x8x16xf32>
    %cst = arith.constant 2.500000e-01 : f32
    %2 = vector.broadcast %cst : f32 to vector<2x8x16xf32>
    %3 = arith.mulf %0, %2 : vector<2x8x16xf32>
    %c0_5 = arith.constant 0 : index
    %c0_6 = arith.constant 0 : index
    %c0_7 = arith.constant 0 : index
    %4 = vector.load %arg4[%c0_5, %c0_6, %c0_7] : memref<2x8x16xf32, #tpu.memory_space<vmem>>, vector<2x8x16xf32>
    "tpu.trace_start"() <{level = 10 : i32, message = "gqd,gkd->gqk"}> : () -> ()
    %cst_8 = arith.constant dense<0.000000e+00> : vector<2x8x8xf32>
    %5 = tpu.matmul %3, %1, %cst_8 {dimension_numbers = #tpu.dot_dimension_numbers<[2], [2], [1], [1], [0, 0, 0, 1, 1, 1], [0], [0]>} : vector<2x8x16xf32>, vector<2x8x16xf32>, vector<2x8x8xf32> -> vector<2x8x8xf32>
    "tpu.trace_stop"() : () -> ()
    %cst_9 = arith.constant dense<0xFF800000> : vector<2x8xf32>
    %6 = vector.multi_reduction <maximumf>, %5, %cst_9 [2] : vector<2x8x8xf32> to vector<2x8xf32>
    %7 = vector.shape_cast %6 : vector<2x8xf32> to vector<2x8x1xf32>
    %8 = vector.broadcast %7 : vector<2x8x1xf32> to vector<2x8x8xf32>
    %9 = arith.subf %5, %8 : vector<2x8x8xf32>
    %10 = math.exp %9 : vector<2x8x8xf32>
    %cst_10 = arith.constant dense<0.000000e+00> : vector<2x8xf32>
    %11 = vector.multi_reduction <add>, %10, %cst_10 [2] : vector<2x8x8xf32> to vector<2x8xf32>
    %12 = vector.shape_cast %11 : vector<2x8xf32> to vector<2x8x1xf32>
    %13 = vector.broadcast %12 : vector<2x8x1xf32> to vector<2x8x8xf32>
    %14 = arith.divf %10, %13 : vector<2x8x8xf32>
    %c0_11 = arith.constant 0 : index
    %c0_12 = arith.constant 0 : index
    %c0_13 = arith.constant 0 : index
    %15 = vector.load %arg5[%c0_11, %c0_12, %c0_13] : memref<2x8x8xf32, #tpu.memory_space<vmem>>, vector<2x8x8xf32>
    %cst_14 = arith.constant 0.699999988 : f32
    %16 = vector.broadcast %cst_14 : f32 to vector<2x8x8xf32>
    %17 = arith.mulf %14, %16 : vector<2x8x8xf32>
    %cst_15 = arith.constant 3.000000e-01 : f32
    %18 = vector.broadcast %cst_15 : f32 to vector<2x8x8xf32>
    %19 = arith.mulf %15, %18 : vector<2x8x8xf32>
    %20 = arith.addf %17, %19 : vector<2x8x8xf32>
    "tpu.trace_start"() <{level = 10 : i32, message = "gqk,gkd->gqd"}> : () -> ()
    %cst_16 = arith.constant dense<0.000000e+00> : vector<2x8x16xf32>
    %21 = tpu.matmul %20, %4, %cst_16 {dimension_numbers = #tpu.dot_dimension_numbers<[2], [1], [1], [2], [0, 0, 0, 1, 1, 2], [0], [0]>} : vector<2x8x8xf32>, vector<2x8x16xf32>, vector<2x8x16xf32> -> vector<2x8x16xf32>
    "tpu.trace_stop"() : () -> ()
    %c0_17 = arith.constant 0 : index
    %c0_18 = arith.constant 0 : index
    %c0_19 = arith.constant 0 : index
    %22 = vector.load %arg6[%c0_17, %c0_18, %c0_19] : memref<2x8x16xf32, #tpu.memory_space<vmem>>, vector<2x8x16xf32>
    tpu.vector_store %arg6[%c0_17, %c0_18, %c0_19], %21 {strides = array<i32>} : memref<2x8x16xf32, #tpu.memory_space<vmem>>, vector<2x8x16xf32>,
    %c0_20 = arith.constant 0 : index
    %c0_21 = arith.constant 0 : index
    %c0_22 = arith.constant 0 : index
    %23 = vector.load %arg7[%c0_20, %c0_21, %c0_22] : memref<2x8x8xf32, #tpu.memory_space<vmem>>, vector<2x8x8xf32>
    tpu.vector_store %arg7[%c0_20, %c0_21, %c0_22], %14 {strides = array<i32>} : memref<2x8x8xf32, #tpu.memory_space<vmem>>, vector<2x8x8xf32>,
    return
  }
  func.func @transform_0(%arg0: i32, %arg1: i32) -> (i32, i32, i32) {
    %c0_i32 = arith.constant 0 : i32
    %c0_i32_0 = arith.constant 0 : i32
    return %arg0, %arg1, %c0_i32 : i32, i32, i32
  }
  func.func @transform_1(%arg0: i32, %arg1: i32) -> (i32, i32, i32) {
    %c0_i32 = arith.constant 0 : i32
    %c0_i32_0 = arith.constant 0 : i32
    %c0_i32_1 = arith.constant 0 : i32
    return %arg0, %c0_i32, %c0_i32_0 : i32, i32, i32
  }
  func.func @transform_2(%arg0: i32, %arg1: i32) -> (i32, i32, i32) {
    %c0_i32 = arith.constant 0 : i32
    %c0_i32_0 = arith.constant 0 : i32
    %c0_i32_1 = arith.constant 0 : i32
    return %arg0, %c0_i32, %c0_i32_0 : i32, i32, i32
  }
  func.func @transform_3(%arg0: i32, %arg1: i32) -> (i32, i32, i32) {
    %c0_i32 = arith.constant 0 : i32
    %c0_i32_0 = arith.constant 0 : i32
    return %arg0, %arg1, %c0_i32 : i32, i32, i32
  }
  func.func @transform_4(%arg0: i32, %arg1: i32) -> (i32, i32, i32) {
    %c0_i32 = arith.constant 0 : i32
    %c0_i32_0 = arith.constant 0 : i32
    return %arg0, %arg1, %c0_i32 : i32, i32, i32
  }
  func.func @transform_5(%arg0: i32, %arg1: i32) -> (i32, i32, i32) {
    %c0_i32 = arith.constant 0 : i32
    %c0_i32_0 = arith.constant 0 : i32
    return %arg0, %arg1, %c0_i32 : i32, i32, i32
  }
}

</mosaic_0001>

<llo_original>
// kernel: tpu_custom_call.1
$region0: #{tpu_custom_call.1}
  #allocation0 [shape = 'u32[]', space=smem, size = 0x4, offset = 0x4, fixed_abs, tag = 'smem constant byte address 0x4 - core index']
  #allocation1 [shape = 'u32[144,128]{1,0:T(1,128)}', space=vmem, size = 0x12000, scoped, tag = 'internal scratch']
  %s0 = inlined_call_operand.hbm [shape: f32[4,8,16], index: 0, kind: input, shape index: {}]
  %s1 = inlined_call_operand.hbm [shape: f32[4,8,16], index: 1, kind: input, shape index: {}]
  %s2 = inlined_call_operand.hbm [shape: f32[4,8,16], index: 2, kind: input, shape index: {}]
  %s3 = inlined_call_operand.hbm [shape: f32[4,8,8], index: 3, kind: input, shape index: {}]
  %s4 = inlined_call_operand.hbm [shape: f32[4,8,16], index: 4, kind: output, shape index: {0}]
  %s5 = inlined_call_operand.hbm [shape: f32[4,8,8], index: 5, kind: output, shape index: {1}]
  %6 = xla_tuple %s4, %s5
  %s7 = sld [smem:[#allocation0]]
  $region73: #{tpu_custom_call.1} parent=0
    _
  %s9 = ssub.s32 1, %s7
  %s10 = scalar_select 0, %s9, %s7
  $region1: #{tpu_custom_call.1} parent=0
    #allocation2 [shape = 'u8[16384]{0}', space=vmem, size = 0x4000, scoped, tag = 'input window, operand 0']
    #allocation3 [shape = 's32[2]{0}', space=sflag, size = 0x8, scoped, tag = 'scoped memory for tpu_custom_call.1']
    #allocation4 [shape = 's32[2]{0}', space=sflag, size = 0x8, scoped, tag = 'scoped memory for tpu_custom_call.1']
    #allocation5 [shape = 'u8[16384]{0}', space=vmem, size = 0x4000, scoped, tag = 'input window, operand 1']
    #allocation6 [shape = 's32[2]{0}', space=sflag, size = 0x8, scoped, tag = 'scoped memory for tpu_custom_call.1']
    #allocation7 [shape = 'u8[16384]{0}', space=vmem, size = 0x4000, scoped, tag = 'input window, operand 2']
    #allocation8 [shape = 'u8[16384]{0}', space=vmem, size = 0x4000, scoped, tag = 'input window, operand 3']
    #allocation9 [shape = 's32[2]{0}', space=sflag, size = 0x8, scoped, tag = 'scoped memory for tpu_custom_call.1']
    #allocation10 [shape = 'u8[16384]{0}', space=vmem, size = 0x4000, scoped, tag = 'output window, operand 0']
    #allocation11 [shape = 'u8[16384]{0}', space=vmem, size = 0x4000, scoped, tag = 'output window, operand 1']
    #allocation12 [shape = 's32[2]{0}', space=sflag, size = 0x8, scoped, tag = 'scoped memory for tpu_custom_call.1']
    %11 = vsyncpa [#allocation3], 0
    %s12 = scalar_lea.sflag [#allocation3], 1
    %13 = vsyncpa %s12, 0
    %14 = vsyncpa [#allocation6], 0
    %s15 = scalar_lea.sflag [#allocation6], 1
    %16 = vsyncpa %s15, 0
    %17 = vsyncpa [#allocation9], 0
    %s18 = scalar_lea.sflag [#allocation9], 1
    %19 = vsyncpa %s18, 0
    %20 = vsyncpa [#allocation4], 0
    %s21 = scalar_lea.sflag [#allocation4], 1
    %22 = vsyncpa %s21, 0
    %23 = vsyncpa [#allocation12], 0
    %s24 = scalar_lea.sflag [#allocation12], 1
    %25 = vsyncpa %s24, 0
    loop: start=0, step=1, limit=4
    $region2: #{tpu_custom_call.1} parent=1 // loop_pre_header
      _
    $region3: #{tpu_custom_call.1} parent=1 // loop_header
      %s27 = sphi 0, %s31
      %p28 = scmp.ge.s32.totalorder %s27, 4
      %s34 = sphi 0, %s46
      %s35 = sphi 0, %s42
      %s36 = sphi 0, %s34
      %s37 = sphi 0, %s35
      %s38 = sphi 0, %s36
      %s39 = sphi 0, %s37
      %s51 = sphi 0, %s53
      %s54 = sphi 0, %s51
      %s55 = sphi 0, %s54
      %s71 = sphi 0, %s55
      %s77 = sphi 0, %s79
      %s80 = sphi 0, %s77
      %s81 = sphi 0, %s80
      %s97 = sphi 0, %s81
      %s103 = sphi 0, %s105
      %s106 = sphi 0, %s103
      %s107 = sphi 0, %s106
      %s123 = sphi 0, %s107
      %s131 = sphi 0, %s133
      %s134 = sphi 0, %s131
      %s135 = sphi 0, %s134
      %s151 = sphi 0, %s135
      %s159 = sphi 0, %s161
      %s162 = sphi 0, %s159
      %s163 = sphi 0, %s162
      %s179 = sphi 0, %s163
      %s187 = sphi 0, %s189
      %s190 = sphi 0, %s187
      %s191 = sphi 0, %s190
      %s207 = sphi 0, %s191
    $region4: #{tpu_custom_call.1} parent=1 // loop_header_branch
      %30 = sbr.rel (%p28) target = $region8
    $region5: #{tpu_custom_call.1} parent=1 // loop_body
      %s32 = ssub.s32 %s27, 1
      %s33 = ssub.s32 %s27, 2
      %s40 = sadd.s32 1, %s35
      %p41 = scmp.ge.s32.totalorder %s40, 1
      %s42 = scalar_select %p41, 0, %s40
      %s43 = sadd.s32 1, %s34
      %s44 = scalar_select %p41, %s43, %s34
      %p45 = scmp.ge.s32.totalorder %s44, 2
      %s46 = scalar_select %p45, 0, %s44
      %s47 = ssub.s32 %s34, %s46
      %s48 = ssub.s32 %s35, %s42
      %s49 = sor.u32 %s47, %s48
      %p50 = scmp.eq.s32.totalorder %s49, 0
      %s52 = sadd.s32 %s51, 1
      %s53 = scalar_select %p50, %s51, %s52
      %p56 = pneg %p50
      %p57 = scmp.eq.s32.totalorder %s27, 1
      %p58 = por %p56, %p57
      %p59 = scmp.ne.s32.totalorder %s51, %s54
      %p60 = scmp.eq.s32.totalorder %s27, 0
      %p61 = por %p59, %p60
      %p62 = scmp.ne.s32.totalorder %s51, %s54
      %p63 = scmp.eq.s32.totalorder %s32, 1
      %p64 = por %p62, %p63
      %p65 = scmp.ne.s32.totalorder %s54, %s55
      %p66 = scmp.eq.s32.totalorder %s32, 0
      %p67 = por %p65, %p66
      %p68 = scmp.ne.s32.totalorder %s54, %s55
      %p69 = scmp.eq.s32.totalorder %s33, 1
      %p70 = por %p68, %p69
      %p72 = scmp.ne.s32.totalorder %s55, %s71
      %p73 = scmp.eq.s32.totalorder %s33, 0
      %p74 = por %p72, %p73
      %s75 = ssub.s32 %s34, %s46
      %p76 = scmp.eq.s32.totalorder %s75, 0
      %s78 = sadd.s32 %s77, 1
      %s79 = scalar_select %p76, %s77, %s78
      %p82 = pneg %p76
      %p83 = scmp.eq.s32.totalorder %s27, 1
      %p84 = por %p82, %p83
      %p85 = scmp.ne.s32.totalorder %s77, %s80
      %p86 = scmp.eq.s32.totalorder %s27, 0
      %p87 = por %p85, %p86
      %p88 = scmp.ne.s32.totalorder %s77, %s80
      %p89 = scmp.eq.s32.totalorder %s32, 1
      %p90 = por %p88, %p89
      %p91 = scmp.ne.s32.totalorder %s80, %s81
      %p92 = scmp.eq.s32.totalorder %s32, 0
      %p93 = por %p91, %p92
      %p94 = scmp.ne.s32.totalorder %s80, %s81
      %p95 = scmp.eq.s32.totalorder %s33, 1
      %p96 = por %p94, %p95
      %p98 = scmp.ne.s32.totalorder %s81, %s97
      %p99 = scmp.eq.s32.totalorder %s33, 0
      %p100 = por %p98, %p99
      %s101 = ssub.s32 %s34, %s46
      %p102 = scmp.eq.s32.totalorder %s101, 0
      %s104 = sadd.s32 %s103, 1
      %s105 = scalar_select %p102, %s103, %s104
      %p108 = pneg %p102
      %p109 = scmp.eq.s32.totalorder %s27, 1
      %p110 = por %p108, %p109
      %p111 = scmp.ne.s32.totalorder %s103, %s106
      %p112 = scmp.eq.s32.totalorder %s27, 0
      %p113 = por %p111, %p112
      %p114 = scmp.ne.s32.totalorder %s103, %s106
      %p115 = scmp.eq.s32.totalorder %s32, 1
      %p116 = por %p114, %p115
      %p117 = scmp.ne.s32.totalorder %s106, %s107
      %p118 = scmp.eq.s32.totalorder %s32, 0
      %p119 = por %p117, %p118
      %p120 = scmp.ne.s32.totalorder %s106, %s107
      %p121 = scmp.eq.s32.totalorder %s33, 1
      %p122 = por %p120, %p121
      %p124 = scmp.ne.s32.totalorder %s107, %s123
      %p125 = scmp.eq.s32.totalorder %s33, 0
      %p126 = por %p124, %p125
      %s127 = ssub.s32 %s34, %s46
      %s128 = ssub.s32 %s35, %s42
      %s129 = sor.u32 %s127, %s128
      %p130 = scmp.eq.s32.totalorder %s129, 0
      %s132 = sadd.s32 %s131, 1
      %s133 = scalar_select %p130, %s131, %s132
      %p136 = pneg %p130
      %p137 = scmp.eq.s32.totalorder %s27, 1
      %p138 = por %p136, %p137
      %p139 = scmp.ne.s32.totalorder %s131, %s134
      %p140 = scmp.eq.s32.totalorder %s27, 0
      %p141 = por %p139, %p140
      %p142 = scmp.ne.s32.totalorder %s131, %s134
      %p143 = scmp.eq.s32.totalorder %s32, 1
      %p144 = por %p142, %p143
      %p145 = scmp.ne.s32.totalorder %s134, %s135
      %p146 = scmp.eq.s32.totalorder %s32, 0
      %p147 = por %p145, %p146
      %p148 = scmp.ne.s32.totalorder %s134, %s135
      %p149 = scmp.eq.s32.totalorder %s33, 1
      %p150 = por %p148, %p149
      %p152 = scmp.ne.s32.totalorder %s135, %s151
      %p153 = scmp.eq.s32.totalorder %s33, 0
      %p154 = por %p152, %p153
      %s155 = ssub.s32 %s34, %s46
      %s156 = ssub.s32 %s35, %s42
      %s157 = sor.u32 %s155, %s156
      %p158 = scmp.eq.s32.totalorder %s157, 0
      %s160 = sadd.s32 %s159, 1
      %s161 = scalar_select %p158, %s159, %s160
      %p164 = pneg %p158
      %p165 = scmp.eq.s32.totalorder %s27, 1
      %p166 = por %p164, %p165
      %p167 = scmp.ne.s32.totalorder %s159, %s162
      %p168 = scmp.eq.s32.totalorder %s27, 0
      %p169 = por %p167, %p168
      %p170 = scmp.ne.s32.totalorder %s159, %s162
      %p171 = scmp.eq.s32.totalorder %s32, 1
      %p172 = por %p170, %p171
      %p173 = scmp.ne.s32.totalorder %s162, %s163
      %p174 = scmp.eq.s32.totalorder %s32, 0
      %p175 = por %p173, %p174
      %p176 = scmp.ne.s32.totalorder %s162, %s163
      %p177 = scmp.eq.s32.totalorder %s33, 1
      %p178 = por %p176, %p177
      %p180 = scmp.ne.s32.totalorder %s163, %s179
      %p181 = scmp.eq.s32.totalorder %s33, 0
      %p182 = por %p180, %p181
      %s183 = ssub.s32 %s34, %s46
      %s184 = ssub.s32 %s35, %s42
      %s185 = sor.u32 %s183, %s184
      %p186 = scmp.eq.s32.totalorder %s185, 0
      %s188 = sadd.s32 %s187, 1
      %s189 = scalar_select %p186, %s187, %s188
      %p192 = pneg %p186
      %p193 = scmp.eq.s32.totalorder %s27, 1
      %p194 = por %p192, %p193
      %p195 = scmp.ne.s32.totalorder %s187, %s190
      %p196 = scmp.eq.s32.totalorder %s27, 0
      %p197 = por %p195, %p196
      %p198 = scmp.ne.s32.totalorder %s187, %s190
      %p199 = scmp.eq.s32.totalorder %s32, 1
      %p200 = por %p198, %p199
      %p201 = scmp.ne.s32.totalorder %s190, %s191
      %p202 = scmp.eq.s32.totalorder %s32, 0
      %p203 = por %p201, %p202
      %p204 = scmp.ne.s32.totalorder %s190, %s191
      %p205 = scmp.eq.s32.totalorder %s33, 1
      %p206 = por %p204, %p205
      %p208 = scmp.ne.s32.totalorder %s191, %s207
      %p209 = scmp.eq.s32.totalorder %s33, 0
      %p210 = por %p208, %p209
      %p211 = scmp.le.s32.totalorder 1, %s27
      %p212 = scmp.lt.s32.totalorder %s27, 3
      %p213 = pnand %p211, %p212
      %p214 = pneg %p213
      // Predicated region
      $region9: #{tpu_custom_call.1} parent=5 // pred_check
        _
      $region10: #{tpu_custom_call.1} parent=5 // pred_check_branch
        %216 = sbr.rel (%p213) target = $region12
      $region11: #{tpu_custom_call.1} parent=5 // pred_region
        %s217 = ssub.s32 %s27, 1
      $region12: #{tpu_custom_call.1} parent=5 // pred_fallthru
        _
      %p218 = scmp.lt.s32.totalorder %s27, 2
      // Predicated region
      $region13: #{tpu_custom_call.1} parent=5 // pred_check
        %p219 = pneg %p218
      $region14: #{tpu_custom_call.1} parent=5 // pred_check_branch
        %221 = sbr.rel (%p219) target = $region16
      $region15: #{tpu_custom_call.1} parent=5 // pred_region
        // Predicated region
        $region17: #{tpu_custom_call.1} parent=15 // pred_check
          %p222 = pneg %p61
        $region18: #{tpu_custom_call.1} parent=15 // pred_check_branch
          %224 = sbr.rel (%p222) target = $region20
        $region19: #{tpu_custom_call.1} parent=15 // pred_region
          %s225 = sand.u32 %s51, 1
          %s226 = scalar_lea.sflag [#allocation3], %s225
          %s227 = sand.u32 %s51, 1
          %s228 = smul.addr %s227, 16
          %s229 = scalar_lea.vmem [#allocation2], %s228
          %s230 = smul.u32 2, %s34
          %s232 = ssub.s32 256, 256
          %233 = vsyncadd %s226, %s232
          %s234 = sadd.s32 %s35, %s230
          %s235 = smul.addr %s234, 128
          %s236 = scalar_lea.hbm %s0, %s235
          %s237 = sshll.u32 %s229, 4
          %s238 = int_to_ptr.vmem [resolvable:$true] %s237
          %243 = dma.hbm_to_vmem [thread:$0]  %s236, 256, %s238, %s226, 128, 128, 8
        $region20: #{tpu_custom_call.1} parent=15 // pred_fallthru
          _
        // Predicated region
        $region21: #{tpu_custom_call.1} parent=15 // pred_check
          %p244 = pneg %p87
        $region22: #{tpu_custom_call.1} parent=15 // pred_check_branch
          %246 = sbr.rel (%p244) target = $region24
        $region23: #{tpu_custom_call.1} parent=15 // pred_region
          %s247 = sand.u32 %s27, 1
          %s248 = scalar_lea.sflag [#allocation6], %s247
          %s249 = sand.u32 %s77, 1
          %s250 = smul.addr %s249, 16
          %s251 = scalar_lea.vmem [#allocation5], %s250
          %s252 = smul.u32 2, %s34
          %s254 = ssub.s32 256, 256
          %255 = vsyncadd %s248, %s254
          %s256 = smul.addr %s252, 128
          %s257 = scalar_lea.hbm %s1, %s256
          %s258 = sshll.u32 %s251, 4
          %s259 = int_to_ptr.vmem [resolvable:$true] %s258
          %264 = dma.hbm_to_vmem [thread:$0]  %s257, 256, %s259, %s248, 128, 128, 8
        $region24: #{tpu_custom_call.1} parent=15 // pred_fallthru
          _
        // Predicated region
        $region25: #{tpu_custom_call.1} parent=15 // pred_check
          %p265 = pneg %p113
        $region26: #{tpu_custom_call.1} parent=15 // pred_check_branch
          %267 = sbr.rel (%p265) target = $region28
        $region27: #{tpu_custom_call.1} parent=15 // pred_region
          %s268 = sand.u32 %s27, 1
          %s269 = scalar_lea.sflag [#allocation6], %s268
          %s270 = sand.u32 %s103, 1
          %s271 = smul.addr %s270, 16
          %s272 = scalar_lea.vmem [#allocation7], %s271
          %s273 = smul.u32 2, %s34
          %s275 = ssub.s32 256, 256
          %276 = vsyncadd %s269, %s275
          %s277 = smul.addr %s273, 128
          %s278 = scalar_lea.hbm %s2, %s277
          %s279 = sshll.u32 %s272, 4
          %s280 = int_to_ptr.vmem [resolvable:$true] %s279
          %285 = dma.hbm_to_vmem [thread:$0]  %s278, 256, %s280, %s269, 128, 128, 8
        $region28: #{tpu_custom_call.1} parent=15 // pred_fallthru
          _
        // Predicated region
        $region29: #{tpu_custom_call.1} parent=15 // pred_check
          %p286 = pneg %p141
        $region30: #{tpu_custom_call.1} parent=15 // pred_check_branch
          %288 = sbr.rel (%p286) target = $region32
        $region31: #{tpu_custom_call.1} parent=15 // pred_region
          %s289 = sand.u32 %s131, 1
          %s290 = scalar_lea.sflag [#allocation9], %s289
          %s291 = sand.u32 %s131, 1
          %s292 = smul.addr %s291, 16
          %s293 = scalar_lea.vmem [#allocation8], %s292
          %s294 = smul.u32 2, %s34
          %s296 = ssub.s32 256, 256
          %297 = vsyncadd %s290, %s296
          %s298 = sadd.s32 %s35, %s294
          %s299 = smul.addr %s298, 128
          %s300 = scalar_lea.hbm %s3, %s299
          %s301 = sshll.u32 %s293, 4
          %s302 = int_to_ptr.vmem [resolvable:$true] %s301
          %307 = dma.hbm_to_vmem [thread:$0]  %s300, 256, %s302, %s290, 128, 128, 8
        $region32: #{tpu_custom_call.1} parent=15 // pred_fallthru
          _
      $region16: #{tpu_custom_call.1} parent=5 // pred_fallthru
        _
      %p308 = scmp.le.s32.totalorder 1, %s27
      %p309 = scmp.lt.s32.totalorder %s27, 3
      %p310 = pnand %p308, %p309
      %p311 = pneg %p310
      // Predicated region
      $region33: #{tpu_custom_call.1} parent=5 // pred_check
        _
      $region34: #{tpu_custom_call.1} parent=5 // pred_check_branch
        %313 = sbr.rel (%p310) target = $region36
      $region35: #{tpu_custom_call.1} parent=5 // pred_region
        %s314 = ssub.s32 %s27, 1
        %s315 = sand.u32 %s54, 1
        %s316 = scalar_lea.sflag [#allocation3], %s315
        %s317 = sand.u32 %s54, 1
        %s318 = smul.addr %s317, 16
        %s319 = scalar_lea.vmem [#allocation2], %s318
        // Predicated region
        $region37: #{tpu_custom_call.1} parent=35 // pred_check
          %p320 = pneg %p67
        $region38: #{tpu_custom_call.1} parent=35 // pred_check_branch
          %322 = sbr.rel (%p320) target = $region40
        $region39: #{tpu_custom_call.1} parent=35 // pred_region
          %323 = dma.done %s316, 256
        $region40: #{tpu_custom_call.1} parent=35 // pred_fallthru
          _
        %s324 = sand.u32 %s32, 1
        %s325 = scalar_lea.sflag [#allocation6], %s324
        %s326 = sand.u32 %s80, 1
        %s327 = smul.addr %s326, 16
        %s328 = scalar_lea.vmem [#allocation5], %s327
        // Predicated region
        $region41: #{tpu_custom_call.1} parent=35 // pred_check
          %p329 = pneg %p93
        $region42: #{tpu_custom_call.1} parent=35 // pred_check_branch
          %331 = sbr.rel (%p329) target = $region44
        $region43: #{tpu_custom_call.1} parent=35 // pred_region
          %332 = dma.done %s325, 256
        $region44: #{tpu_custom_call.1} parent=35 // pred_fallthru
          _
        %s333 = sand.u32 %s32, 1
        %s334 = scalar_lea.sflag [#allocation6], %s333
        %s335 = sand.u32 %s106, 1
        %s336 = smul.addr %s335, 16
        %s337 = scalar_lea.vmem [#allocation7], %s336
        // Predicated region
        $region45: #{tpu_custom_call.1} parent=35 // pred_check
          %p338 = pneg %p119
        $region46: #{tpu_custom_call.1} parent=35 // pred_check_branch
          %340 = sbr.rel (%p338) target = $region48
        $region47: #{tpu_custom_call.1} parent=35 // pred_region
          %341 = dma.done %s334, 256
        $region48: #{tpu_custom_call.1} parent=35 // pred_fallthru
          _
        %s342 = sand.u32 %s134, 1
        %s343 = scalar_lea.sflag [#allocation9], %s342
        %s344 = sand.u32 %s134, 1
        %s345 = smul.addr %s344, 16
        %s346 = scalar_lea.vmem [#allocation8], %s345
        // Predicated region
        $region49: #{tpu_custom_call.1} parent=35 // pred_check
          %p347 = pneg %p147
        $region50: #{tpu_custom_call.1} parent=35 // pred_check_branch
          %349 = sbr.rel (%p347) target = $region52
        $region51: #{tpu_custom_call.1} parent=35 // pred_region
          %350 = dma.done %s343, 256
        $region52: #{tpu_custom_call.1} parent=35 // pred_fallthru
          _
        %s351 = sand.u32 %s54, 1
        %s352 = scalar_lea.sflag [#allocation3], %s351
        %s353 = sand.u32 %s54, 1
        %s354 = smul.addr %s353, 16
        %s355 = scalar_lea.vmem [#allocation2], %s354
        %p356 = pneg %p67
        %p357 = pneg %p64
        %s358 = sand.u32 %s32, 1
        %s359 = scalar_lea.sflag [#allocation6], %s358
        %s360 = sand.u32 %s80, 1
        %s361 = smul.addr %s360, 16
        %s362 = scalar_lea.vmem [#allocation5], %s361
        %p363 = pneg %p93
        %p364 = pneg %p90
        %s365 = sand.u32 %s32, 1
        %s366 = scalar_lea.sflag [#allocation6], %s365
        %s367 = sand.u32 %s106, 1
        %s368 = smul.addr %s367, 16
        %s369 = scalar_lea.vmem [#allocation7], %s368
        %p370 = pneg %p119
        %p371 = pneg %p116
        %s372 = sand.u32 %s134, 1
        %s373 = scalar_lea.sflag [#allocation9], %s372
        %s374 = sand.u32 %s134, 1
        %s375 = smul.addr %s374, 16
        %s376 = scalar_lea.vmem [#allocation8], %s375
        %p377 = pneg %p147
        %p378 = pneg %p144
        %p379 = pneg %p175
        %p380 = pneg %p172
        %s381 = sand.u32 %s162, 1
        %s382 = scalar_lea.sflag [#allocation4], %s381
        %s383 = sand.u32 %s162, 1
        %s384 = smul.addr %s383, 16
        %s385 = scalar_lea.vmem [#allocation10], %s384
        %p386 = pneg %p203
        %p387 = pneg %p200
        %s388 = sand.u32 %s190, 1
        %s389 = scalar_lea.sflag [#allocation12], %s388
        %s390 = sand.u32 %s190, 1
        %s391 = smul.addr %s390, 16
        %s392 = scalar_lea.vmem [#allocation11], %s391
        %s393 = smul.u32 2, %s36
        %s394 = smul.u32 2, %s36
        %s395 = smul.u32 2, %s36
        %s396 = smul.u32 2, %s36
        %s397 = smul.u32 2, %s36
        %s398 = smul.u32 2, %s36
        %v399 = vld [vmem:[%s319] sm:$0xff]
        %v400 = vld [vmem:[%s319 + $0x8] sm:$0xff]
        %v401 = vld [vmem:[%s328] sm:$0xff]
        %v402 = vld [vmem:[%s328 + $0x8] sm:$0xff]
        %v403 = vmul.f32 %v399, 0.25
        %v404 = vmul.f32 %v400, 0.25
        %v405 = vld [vmem:[%s337] sm:$0xff]
        %v406 = vld [vmem:[%s337 + $0x8] sm:$0xff]
        %vm407 = vcmask 130048
        %v409 = vsel %vm407, %v403, 0
        %v412 = vsel %vm407, %v401, 0
        %414 = vmatprep.subr.mxu0 0.0
        %415 = vmatpush1.xpose.msra.mxu0 %v412
        %416 = vmatprep.subr.mxu0 0.0
        %417 = vmatpush1.xpose.msra.mxu0 0.0
        %418 = vmatprep.subr.mxu0 0.0
        %419 = vmatpush1.xpose.msra.mxu0 0.0
        %420 = vmatprep.subr.mxu0 0.0
        %421 = vmatpush1.xpose.msra.mxu0 0.0
        %422 = vmatprep.subr.mxu0 0.0
        %423 = vmatpush1.xpose.msra.mxu0 0.0
        %424 = vmatprep.subr.mxu0 0.0
        %425 = vmatpush1.xpose.msra.mxu0 0.0
        %426 = vmatprep.subr.mxu0 0.0
        %427 = vmatpush1.xpose.msra.mxu0 0.0
        %428 = vmatprep.subr.mxu0 0.0
        %429 = vmatpush1.xpose.msra.mxu0 0.0
        %430 = vmatprep.subr.mxu0 0.0
        %431 = vmatpush1.xpose.msra.mxu0 0.0
        %432 = vmatprep.subr.mxu0 0.0
        %433 = vmatpush1.xpose.msra.mxu0 0.0
        %434 = vmatprep.subr.mxu0 0.0
        %435 = vmatpush1.xpose.msra.mxu0 0.0
        %436 = vmatprep.subr.mxu0 0.0
        %437 = vmatpush1.xpose.msra.mxu0 0.0
        %438 = vmatprep.subr.mxu0 0.0
        %439 = vmatpush1.xpose.msra.mxu0 0.0
        %440 = vmatprep.subr.mxu0 0.0
        %441 = vmatpush1.xpose.msra.mxu0 0.0
        %442 = vmatprep.subr.mxu0 0.0
        %443 = vmatpush1.xpose.msra.mxu0 0.0
        %444 = vmatprep.subr.mxu0 0.0
        %445 = vmatpush1.xpose.msra.mxu0 0.0
        %446 = vmatprep.subr.mxu0 0.0
        %447 = vmatpush1.xpose.msra.mxu0 0.0
        %448 = vmatprep.subr.mxu0 0.0
        %449 = vmatpush1.xpose.msra.mxu0 0.0
        %450 = vmatprep.subr.mxu0 0.0
        %451 = vmatpush1.xpose.msra.mxu0 0.0
        %452 = vmatprep.subr.mxu0 0.0
        %453 = vmatpush1.xpose.msra.mxu0 0.0
        %454 = vmatprep.subr.mxu0 0.0
        %455 = vmatpush1.xpose.msra.mxu0 0.0
        %456 = vmatprep.subr.mxu0 0.0
        %457 = vmatpush1.xpose.msra.mxu0 0.0
        %458 = vmatprep.subr.mxu0 0.0
        %459 = vmatpush1.xpose.msra.mxu0 0.0
        %460 = vmatprep.subr.mxu0 0.0
        %461 = vmatpush1.xpose.msra.mxu0 0.0
        %462 = vmatprep.subr.mxu0 0.0
        %463 = vmatpush1.xpose.msra.mxu0 0.0
        %464 = vmatprep.subr.mxu0 0.0
        %465 = vmatpush1.xpose.msra.mxu0 0.0
        %466 = vmatprep.subr.mxu0 0.0
        %467 = vmatpush1.xpose.msra.mxu0 0.0
        %468 = vmatprep.subr.mxu0 0.0
        %469 = vmatpush1.xpose.msra.mxu0 0.0
        %470 = vmatprep.subr.mxu0 0.0
        %471 = vmatpush1.xpose.msra.mxu0 0.0
        %472 = vmatprep.subr.mxu0 0.0
        %473 = vmatpush1.xpose.msra.mxu0 0.0
        %474 = vmatprep.subr.mxu0 0.0
        %475 = vmatpush1.xpose.msra.mxu0 0.0
        %476 = vmatprep.subr.mxu0 0.0
        %477 = vmatpush1.xpose.msra.mxu0 0.0
        %478 = vmatprep.mubr.f32.mxu0 0.0
        %479 = vmatmul.mubr.f32.gmra.mrb[0].mxu0 %v409
        %v480 = vpop.f32.mrb[0].mxu0
        %v481 = vadd.f32 0.0, %v480
        %v482 = vpop.f32.mrb[0].mxu0
        %483 = vdwg.mxu0
        %v485 = vsel %vm407, %v404, 0
        %v488 = vsel %vm407, %v402, 0
        %490 = vmatprep.subr.mxu0 0.0
        %491 = vmatpush1.xpose.msra.mxu0 %v488
        %492 = vmatprep.subr.mxu0 0.0
        %493 = vmatpush1.xpose.msra.mxu0 0.0
        %494 = vmatprep.subr.mxu0 0.0
        %495 = vmatpush1.xpose.msra.mxu0 0.0
        %496 = vmatprep.subr.mxu0 0.0
        %497 = vmatpush1.xpose.msra.mxu0 0.0
        %498 = vmatprep.subr.mxu0 0.0
        %499 = vmatpush1.xpose.msra.mxu0 0.0
        %500 = vmatprep.subr.mxu0 0.0
        %501 = vmatpush1.xpose.msra.mxu0 0.0
        %502 = vmatprep.subr.mxu0 0.0
        %503 = vmatpush1.xpose.msra.mxu0 0.0
        %504 = vmatprep.subr.mxu0 0.0
        %505 = vmatpush1.xpose.msra.mxu0 0.0
        %506 = vmatprep.subr.mxu0 0.0
        %507 = vmatpush1.xpose.msra.mxu0 0.0
        %508 = vmatprep.subr.mxu0 0.0
        %509 = vmatpush1.xpose.msra.mxu0 0.0
        %510 = vmatprep.subr.mxu0 0.0
        %511 = vmatpush1.xpose.msra.mxu0 0.0
        %512 = vmatprep.subr.mxu0 0.0
        %513 = vmatpush1.xpose.msra.mxu0 0.0
        %514 = vmatprep.subr.mxu0 0.0
        %515 = vmatpush1.xpose.msra.mxu0 0.0
        %516 = vmatprep.subr.mxu0 0.0
        %517 = vmatpush1.xpose.msra.mxu0 0.0
        %518 = vmatprep.subr.mxu0 0.0
        %519 = vmatpush1.xpose.msra.mxu0 0.0
        %520 = vmatprep.subr.mxu0 0.0
        %521 = vmatpush1.xpose.msra.mxu0 0.0
        %522 = vmatprep.subr.mxu0 0.0
        %523 = vmatpush1.xpose.msra.mxu0 0.0
        %524 = vmatprep.subr.mxu0 0.0
        %525 = vmatpush1.xpose.msra.mxu0 0.0
        %526 = vmatprep.subr.mxu0 0.0
        %527 = vmatpush1.xpose.msra.mxu0 0.0
        %528 = vmatprep.subr.mxu0 0.0
        %529 = vmatpush1.xpose.msra.mxu0 0.0
        %530 = vmatprep.subr.mxu0 0.0
        %531 = vmatpush1.xpose.msra.mxu0 0.0
        %532 = vmatprep.subr.mxu0 0.0
        %533 = vmatpush1.xpose.msra.mxu0 0.0
        %534 = vmatprep.subr.mxu0 0.0
        %535 = vmatpush1.xpose.msra.mxu0 0.0
        %536 = vmatprep.subr.mxu0 0.0
        %537 = vmatpush1.xpose.msra.mxu0 0.0
        %538 = vmatprep.subr.mxu0 0.0
        %539 = vmatpush1.xpose.msra.mxu0 0.0
        %540 = vmatprep.subr.mxu0 0.0
        %541 = vmatpush1.xpose.msra.mxu0 0.0
        %542 = vmatprep.subr.mxu0 0.0
        %543 = vmatpush1.xpose.msra.mxu0 0.0
        %544 = vmatprep.subr.mxu0 0.0
        %545 = vmatpush1.xpose.msra.mxu0 0.0
        %546 = vmatprep.subr.mxu0 0.0
        %547 = vmatpush1.xpose.msra.mxu0 0.0
        %548 = vmatprep.subr.mxu0 0.0
        %549 = vmatpush1.xpose.msra.mxu0 0.0
        %550 = vmatprep.subr.mxu0 0.0
        %551 = vmatpush1.xpose.msra.mxu0 0.0
        %552 = vmatprep.subr.mxu0 0.0
        %553 = vmatpush1.xpose.msra.mxu0 0.0
        %554 = vmatprep.mubr.f32.mxu0 0.0
        %555 = vmatmul.mubr.f32.gmra.mrb[0].mxu0 %v485
        %v556 = vpop.f32.mrb[0].mxu0
        %v557 = vadd.f32 0.0, %v556
        %v558 = vpop.f32.mrb[0].mxu0
        %559 = vdwg.mxu0
        %vm560 = vcmask 64512
        %v561 = vsel %vm560, %v481, -inf
        %562 = vmax.xlane.f32.xlu0 %v561
        %v563 = vpop.xlane.xlu0 %562
        %v564 = vsel %vm560, %v557, -inf
        %565 = vmax.xlane.f32.xlu0 %v564
        %v566 = vpop.xlane.xlu0 %565
        %v567 = vsub.f32 %v481, %v563
        %v568 = vsub.f32 %v557, %v566
        %v569 = vmul.f32 %v567, 1.442695
        %v570 = vpow.pop %v569
        %v571 = vmul.f32 %v568, 1.442695
        %v572 = vpow.pop %v571
        %v573 = vsel %vm560, %v570, 0.0
        %574 = vadd.xlane.f32.xlu0 %v573
        %v575 = vpop.xlane.xlu0 %574
        %v576 = vsel %vm560, %v572, 0.0
        %577 = vadd.xlane.f32.xlu0 %v576
        %v578 = vpop.xlane.xlu0 %577
        %v579 = vrcp.pop %v575
        %v580 = vmul.f32 %v570, %v579
        %v581 = vrcp.pop %v578
        %v582 = vmul.f32 %v572, %v581
        %v583 = vld [vmem:[%s346] sm:$0xff]
        %v584 = vld [vmem:[%s346 + $0x8] sm:$0xff]
        %v585 = vmul.f32 %v580, 0.7
        %v586 = vmul.f32 %v582, 0.7
        %v587 = vmul.f32 %v583, 0.3
        %v588 = vmul.f32 %v584, 0.3
        %v589 = vadd.f32 %v585, %v587
        %v590 = vadd.f32 %v586, %v588
        %v592 = vsel %vm560, %v589, 0
        %594 = vmatprep.subr.mxu0 0.0
        %595 = vmatpush1.msra.mxu0 %v405
        %596 = vmatprep.subr.mxu0 0.0
        %597 = vmatpush1.msra.mxu0 0.0
        %598 = vmatprep.subr.mxu0 0.0
        %599 = vmatpush1.msra.mxu0 0.0
        %600 = vmatprep.subr.mxu0 0.0
        %601 = vmatpush1.msra.mxu0 0.0
        %602 = vmatprep.subr.mxu0 0.0
        %603 = vmatpush1.msra.mxu0 0.0
        %604 = vmatprep.subr.mxu0 0.0
        %605 = vmatpush1.msra.mxu0 0.0
        %606 = vmatprep.subr.mxu0 0.0
        %607 = vmatpush1.msra.mxu0 0.0
        %608 = vmatprep.subr.mxu0 0.0
        %609 = vmatpush1.msra.mxu0 0.0
        %610 = vmatprep.subr.mxu0 0.0
        %611 = vmatpush1.msra.mxu0 0.0
        %612 = vmatprep.subr.mxu0 0.0
        %613 = vmatpush1.msra.mxu0 0.0
        %614 = vmatprep.subr.mxu0 0.0
        %615 = vmatpush1.msra.mxu0 0.0
        %616 = vmatprep.subr.mxu0 0.0
        %617 = vmatpush1.msra.mxu0 0.0
        %618 = vmatprep.subr.mxu0 0.0
        %619 = vmatpush1.msra.mxu0 0.0
        %620 = vmatprep.subr.mxu0 0.0
        %621 = vmatpush1.msra.mxu0 0.0
        %622 = vmatprep.subr.mxu0 0.0
        %623 = vmatpush1.msra.mxu0 0.0
        %624 = vmatprep.subr.mxu0 0.0
        %625 = vmatpush1.msra.mxu0 0.0
        %626 = vmatprep.subr.mxu0 0.0
        %627 = vmatpush1.msra.mxu0 0.0
        %628 = vmatprep.subr.mxu0 0.0
        %629 = vmatpush1.msra.mxu0 0.0
        %630 = vmatprep.subr.mxu0 0.0
        %631 = vmatpush1.msra.mxu0 0.0
        %632 = vmatprep.subr.mxu0 0.0
        %633 = vmatpush1.msra.mxu0 0.0
        %634 = vmatprep.subr.mxu0 0.0
        %635 = vmatpush1.msra.mxu0 0.0
        %636 = vmatprep.subr.mxu0 0.0
        %637 = vmatpush1.msra.mxu0 0.0
        %638 = vmatprep.subr.mxu0 0.0
        %639 = vmatpush1.msra.mxu0 0.0
        %640 = vmatprep.subr.mxu0 0.0
        %641 = vmatpush1.msra.mxu0 0.0
        %642 = vmatprep.subr.mxu0 0.0
        %643 = vmatpush1.msra.mxu0 0.0
        %644 = vmatprep.subr.mxu0 0.0
        %645 = vmatpush1.msra.mxu0 0.0
        %646 = vmatprep.subr.mxu0 0.0
        %647 = vmatpush1.msra.mxu0 0.0
        %648 = vmatprep.subr.mxu0 0.0
        %649 = vmatpush1.msra.mxu0 0.0
        %650 = vmatprep.subr.mxu0 0.0
        %651 = vmatpush1.msra.mxu0 0.0
        %652 = vmatprep.subr.mxu0 0.0
        %653 = vmatpush1.msra.mxu0 0.0
        %654 = vmatprep.subr.mxu0 0.0
        %655 = vmatpush1.msra.mxu0 0.0
        %656 = vmatprep.subr.mxu0 0.0
        %657 = vmatpush1.msra.mxu0 0.0
        %658 = vmatprep.mubr.f32.mxu0 0.0
        %659 = vmatmul.mubr.f32.gmra.mrb[0].mxu0 %v592
        %v660 = vpop.f32.mrb[0].mxu0
        %v661 = vadd.f32 0.0, %v660
        %v662 = vpop.f32.mrb[0].mxu0
        %663 = vdwg.mxu0
        %v665 = vsel %vm560, %v590, 0
        %667 = vmatprep.subr.mxu0 0.0
        %668 = vmatpush1.msra.mxu0 %v406
        %669 = vmatprep.subr.mxu0 0.0
        %670 = vmatpush1.msra.mxu0 0.0
        %671 = vmatprep.subr.mxu0 0.0
        %672 = vmatpush1.msra.mxu0 0.0
        %673 = vmatprep.subr.mxu0 0.0
        %674 = vmatpush1.msra.mxu0 0.0
        %675 = vmatprep.subr.mxu0 0.0
        %676 = vmatpush1.msra.mxu0 0.0
        %677 = vmatprep.subr.mxu0 0.0
        %678 = vmatpush1.msra.mxu0 0.0
        %679 = vmatprep.subr.mxu0 0.0
        %680 = vmatpush1.msra.mxu0 0.0
        %681 = vmatprep.subr.mxu0 0.0
        %682 = vmatpush1.msra.mxu0 0.0
        %683 = vmatprep.subr.mxu0 0.0
        %684 = vmatpush1.msra.mxu0 0.0
        %685 = vmatprep.subr.mxu0 0.0
        %686 = vmatpush1.msra.mxu0 0.0
        %687 = vmatprep.subr.mxu0 0.0
        %688 = vmatpush1.msra.mxu0 0.0
        %689 = vmatprep.subr.mxu0 0.0
        %690 = vmatpush1.msra.mxu0 0.0
        %691 = vmatprep.subr.mxu0 0.0
        %692 = vmatpush1.msra.mxu0 0.0
        %693 = vmatprep.subr.mxu0 0.0
        %694 = vmatpush1.msra.mxu0 0.0
        %695 = vmatprep.subr.mxu0 0.0
        %696 = vmatpush1.msra.mxu0 0.0
        %697 = vmatprep.subr.mxu0 0.0
        %698 = vmatpush1.msra.mxu0 0.0
        %699 = vmatprep.subr.mxu0 0.0
        %700 = vmatpush1.msra.mxu0 0.0
        %701 = vmatprep.subr.mxu0 0.0
        %702 = vmatpush1.msra.mxu0 0.0
        %703 = vmatprep.subr.mxu0 0.0
        %704 = vmatpush1.msra.mxu0 0.0
        %705 = vmatprep.subr.mxu0 0.0
        %706 = vmatpush1.msra.mxu0 0.0
        %707 = vmatprep.subr.mxu0 0.0
        %708 = vmatpush1.msra.mxu0 0.0
        %709 = vmatprep.subr.mxu0 0.0
        %710 = vmatpush1.msra.mxu0 0.0
        %711 = vmatprep.subr.mxu0 0.0
        %712 = vmatpush1.msra.mxu0 0.0
        %713 = vmatprep.subr.mxu0 0.0
        %714 = vmatpush1.msra.mxu0 0.0
        %715 = vmatprep.subr.mxu0 0.0
        %716 = vmatpush1.msra.mxu0 0.0
        %717 = vmatprep.subr.mxu0 0.0
        %718 = vmatpush1.msra.mxu0 0.0
        %719 = vmatprep.subr.mxu0 0.0
        %720 = vmatpush1.msra.mxu0 0.0
        %721 = vmatprep.subr.mxu0 0.0
        %722 = vmatpush1.msra.mxu0 0.0
        %723 = vmatprep.subr.mxu0 0.0
        %724 = vmatpush1.msra.mxu0 0.0
        %725 = vmatprep.subr.mxu0 0.0
        %726 = vmatpush1.msra.mxu0 0.0
        %727 = vmatprep.subr.mxu0 0.0
        %728 = vmatpush1.msra.mxu0 0.0
        %729 = vmatprep.subr.mxu0 0.0
        %730 = vmatpush1.msra.mxu0 0.0
        %731 = vmatprep.mubr.f32.mxu0 0.0
        %732 = vmatmul.mubr.f32.gmra.mrb[0].mxu0 %v665
        %v733 = vpop.f32.mrb[0].mxu0
        %v734 = vadd.f32 0.0, %v733
        %v735 = vpop.f32.mrb[0].mxu0
        %736 = vdwg.mxu0
        %737 = vst.msk [vmem:[%s385] sm:$0xff] %vm407, %v661
        %738 = vst.msk [vmem:[%s385 + $0x8] sm:$0xff] %vm407, %v734
        %739 = vst.msk [vmem:[%s392] sm:$0xff] %vm560, %v580
        %740 = vst.msk [vmem:[%s392 + $0x8] sm:$0xff] %vm560, %v582
        %s741 = sand.u32 %s162, 1
        %s742 = scalar_lea.sflag [#allocation4], %s741
        %s743 = sand.u32 %s162, 1
        %s744 = smul.addr %s743, 16
        %s745 = scalar_lea.vmem [#allocation10], %s744
        %s746 = sand.u32 %s190, 1
        %s747 = scalar_lea.sflag [#allocation12], %s746
        %s748 = sand.u32 %s190, 1
        %s749 = smul.addr %s748, 16
        %s750 = scalar_lea.vmem [#allocation11], %s749
        // Predicated region
        $region53: #{tpu_custom_call.1} parent=35 // pred_check
          %p751 = pneg %p172
        $region54: #{tpu_custom_call.1} parent=35 // pred_check_branch
          %753 = sbr.rel (%p751) target = $region56
        $region55: #{tpu_custom_call.1} parent=35 // pred_region
          %s754 = smul.u32 2, %s36
          %s756 = ssub.s32 256, 256
          %757 = vsyncadd %s742, %s756
          %s758 = sadd.s32 %s37, %s754
          %s759 = smul.addr %s758, 128
          %s760 = scalar_lea.hbm %s4, %s759
          %s761 = sshll.u32 %s745, 4
          %s762 = int_to_ptr.vmem [resolvable:$true] %s761
          %767 = dma.vmem_to_hbm [thread:$0]  %s762, 256, %s760, %s742, 128, 128, 8
        $region56: #{tpu_custom_call.1} parent=35 // pred_fallthru
          _
        // Predicated region
        $region57: #{tpu_custom_call.1} parent=35 // pred_check
          %p768 = pneg %p200
        $region58: #{tpu_custom_call.1} parent=35 // pred_check_branch
          %770 = sbr.rel (%p768) target = $region60
        $region59: #{tpu_custom_call.1} parent=35 // pred_region
          %s771 = smul.u32 2, %s36
          %s773 = ssub.s32 256, 256
          %774 = vsyncadd %s747, %s773
          %s775 = sadd.s32 %s37, %s771
          %s776 = smul.addr %s775, 128
          %s777 = scalar_lea.hbm %s5, %s776
          %s778 = sshll.u32 %s750, 4
          %s779 = int_to_ptr.vmem [resolvable:$true] %s778
          %784 = dma.vmem_to_hbm [thread:$0]  %s779, 256, %s777, %s747, 128, 128, 8
        $region60: #{tpu_custom_call.1} parent=35 // pred_fallthru
          _
      $region36: #{tpu_custom_call.1} parent=5 // pred_fallthru
        _
      %p785 = scmp.le.s32.totalorder 2, %s27
      // Predicated region
      $region61: #{tpu_custom_call.1} parent=5 // pred_check
        %p786 = pneg %p785
      $region62: #{tpu_custom_call.1} parent=5 // pred_check_branch
        %788 = sbr.rel (%p786) target = $region64
      $region63: #{tpu_custom_call.1} parent=5 // pred_region
        %s789 = ssub.s32 %s27, 2
        // Predicated region
        $region65: #{tpu_custom_call.1} parent=63 // pred_check
          %p790 = pneg %p178
        $region66: #{tpu_custom_call.1} parent=63 // pred_check_branch
          %792 = sbr.rel (%p790) target = $region68
        $region67: #{tpu_custom_call.1} parent=63 // pred_region
          %s793 = sand.u32 %s163, 1
          %s794 = scalar_lea.sflag [#allocation4], %s793
          %s795 = sand.u32 %s163, 1
          %s796 = smul.addr %s795, 16
          %s797 = scalar_lea.vmem [#allocation10], %s796
          %798 = dma.done %s794, 256
        $region68: #{tpu_custom_call.1} parent=63 // pred_fallthru
          _
        // Predicated region
        $region69: #{tpu_custom_call.1} parent=63 // pred_check
          %p799 = pneg %p206
        $region70: #{tpu_custom_call.1} parent=63 // pred_check_branch
          %801 = sbr.rel (%p799) target = $region72
        $region71: #{tpu_custom_call.1} parent=63 // pred_region
          %s802 = sand.u32 %s191, 1
          %s803 = scalar_lea.sflag [#allocation12], %s802
          %s804 = sand.u32 %s191, 1
          %s805 = smul.addr %s804, 16
          %s806 = scalar_lea.vmem [#allocation11], %s805
          %807 = dma.done %s803, 256
        $region72: #{tpu_custom_call.1} parent=63 // pred_fallthru
          _
      $region64: #{tpu_custom_call.1} parent=5 // pred_fallthru
        _
    $region6: #{tpu_custom_call.1} parent=1 // loop_footer
      %s31 = sadd.s32 1, %s27
    $region7: #{tpu_custom_call.1} parent=1 // loop_footer_branch
      %26 = sbr.rel target = $region3
    $region8: #{tpu_custom_call.1} parent=1 // loop_exit
      _
    %808 = vsyncpa [#allocation3], 1
    %s809 = scalar_lea.sflag [#allocation3], 1
    %810 = vsyncpa %s809, 1
    %811 = vsyncpa [#allocation6], 1
    %s812 = scalar_lea.sflag [#allocation6], 1
    %813 = vsyncpa %s812, 1
    %814 = vsyncpa [#allocation9], 1
    %s815 = scalar_lea.sflag [#allocation9], 1
    %816 = vsyncpa %s815, 1
    %817 = vsyncpa [#allocation4], 1
    %s818 = scalar_lea.sflag [#allocation4], 1
    %819 = vsyncpa %s818, 1
    %820 = vsyncpa [#allocation12], 1
    %s821 = scalar_lea.sflag [#allocation12], 1
    %822 = vsyncpa %s821, 1

</llo_original>
